<compile_context>
chip_gen: v7x
topology: tpu7x:2x2x1
jax: 0.10.0
libtpu: 0.0.40
codegen_flags: <defaults>
</compile_context>

<pallas_src>
import functools

import jax
import jax.numpy as jnp
from jax.experimental import pallas as pl
from jax.experimental.pallas import tpu as pltpu


def _anchor_repeat_kernel(x_ref, o_ref, *, s2):
    # x_ref: (Cin, tile_hw), o_ref: (Cin * s2, tile_hw)
    cin, thw = x_ref.shape
    for c in range(cin):
        # Repeat-interleave: input channel c feeds output channels
        # [c*s2, (c+1)*s2).  Sublane broadcast; lane axis stays dense.
        o_ref[c * s2:(c + 1) * s2, :] = jnp.broadcast_to(
            x_ref[c:c + 1, :], (s2, thw))


def anchor_op_pallas(x_nchw, scaling_factor, *, tile_hw=None):
    """AnchorOp forward: repeat_interleave(x, scaling_factor**2, channel).

    Args:
      x_nchw: (N, C_in, H, W) array (any float dtype; kept as-is).
      scaling_factor: int upsampling factor (output has C_in * sf**2 channels).
      tile_hw: optional lane-tile size over the flattened H*W axis.
    Returns:
      (N, C_in * scaling_factor**2, H, W) array, same dtype as input.
    """
    N, Cin, H, W = x_nchw.shape
    s2 = int(scaling_factor) ** 2
    Cout = Cin * s2
    HW = H * W

    # NCHW-native: only flatten the spatial dims (free metadata reshape —
    # no transpose, no extra HBM traffic).
    x3 = x_nchw.reshape(N, Cin, HW)

    if tile_hw is None:
        # Large lane-dense tiles; cap keeps the double-buffered VMEM footprint
        # to a few MiB even with sublane padding (Cin->8, Cout->16 rows).
        tile_hw = min(16384, pl.cdiv(HW, 128) * 128)

    grid = (N, pl.cdiv(HW, tile_hw))

    kernel = functools.partial(_anchor_repeat_kernel, s2=s2)

    itemsize = jnp.dtype(x_nchw.dtype).itemsize
    bytes_accessed = (1 + s2) * N * Cin * HW * itemsize

    out3 = pl.pallas_call(
        kernel,
        out_shape=jax.ShapeDtypeStruct((N, Cout, HW), x_nchw.dtype),
        grid_spec=pl.GridSpec(
            grid=grid,
            in_specs=[
                pl.BlockSpec((None, Cin, tile_hw), lambda n, j: (n, 0, j)),
            ],
            out_specs=pl.BlockSpec((None, Cout, tile_hw), lambda n, j: (n, 0, j)),
        ),
        compiler_params=pltpu.CompilerParams(
            dimension_semantics=("parallel", "parallel")),
        cost_estimate=pl.CostEstimate(
            flops=0, transcendentals=0, bytes_accessed=bytes_accessed),
    )(x3)

    return out3.reshape(N, Cout, H, W)


if __name__ == "__main__":
    scaling_factor = 2
    in_channels = 3  # module default
    N, H, W = 2, 16, 16

    key = jax.random.PRNGKey(0)
    x = jax.random.normal(key, (N, in_channels, H, W), dtype=jnp.float32)

    out = anchor_op_pallas(x, scaling_factor)
    out = jax.block_until_ready(out)

    # Reference: AnchorOp(init_weights=True) == repeat_interleave along channel.
    ref = jnp.repeat(x, scaling_factor ** 2, axis=1)
    assert out.shape == (N, in_channels * scaling_factor ** 2, H, W)
    assert jnp.allclose(out, ref), "mismatch vs repeat_interleave reference"

    print("KERNEL_OK")
</pallas_src>

<mosaic_0001>
module attributes {stable_mosaic.version = 11 : i64} {
  func.func @_anchor_repeat_kernel(%arg0: i32, %arg1: i32, %arg2: memref<1x3x256xf32, #tpu.memory_space<vmem>>, %arg3: memref<1x12x256xf32, #tpu.memory_space<vmem>>) attributes {dimension_semantics = [#tpu.dimension_semantics<parallel>, #tpu.dimension_semantics<parallel>], iteration_bounds = array<i64: 2, 1>, scalar_prefetch = 0 : i64, scratch_operands = 0 : i64, tpu.core_type = #tpu.core_type<tc>, window_params = [{transform_indices = @transform_0, window_bounds = array<i64: 1, 3, 256>}, {transform_indices = @transform_1, window_bounds = array<i64: 1, 12, 256>}]} {
    %c0 = arith.constant 0 : index
    %c0_0 = arith.constant 0 : index
    %c0_1 = arith.constant 0 : index
    %0 = vector.load %arg2[%c0, %c0_0, %c0_1] : memref<1x3x256xf32, #tpu.memory_space<vmem>>, vector<1x1x256xf32>
    %1 = vector.shape_cast %0 : vector<1x1x256xf32> to vector<1x256xf32>
    %2 = vector.shape_cast %1 : vector<1x256xf32> to vector<1x256xf32>
    %3 = vector.broadcast %2 : vector<1x256xf32> to vector<4x256xf32>
    %c0_2 = arith.constant 0 : index
    %c0_3 = arith.constant 0 : index
    %c0_4 = arith.constant 0 : index
    %4 = vector.load %arg3[%c0_2, %c0_3, %c0_4] : memref<1x12x256xf32, #tpu.memory_space<vmem>>, vector<1x4x256xf32>
    %5 = vector.shape_cast %4 : vector<1x4x256xf32> to vector<4x256xf32>
    %6 = vector.shape_cast %3 : vector<4x256xf32> to vector<1x4x256xf32>
    tpu.vector_store %arg3[%c0_2, %c0_3, %c0_4], %6 {strides = array<i32>} : memref<1x12x256xf32, #tpu.memory_space<vmem>>, vector<1x4x256xf32>,
    %c0_5 = arith.constant 0 : index
    %c1 = arith.constant 1 : index
    %c0_6 = arith.constant 0 : index
    %7 = vector.load %arg2[%c0_5, %c1, %c0_6] : memref<1x3x256xf32, #tpu.memory_space<vmem>>, vector<1x1x256xf32>
    %8 = vector.shape_cast %7 : vector<1x1x256xf32> to vector<1x256xf32>
    %9 = vector.shape_cast %8 : vector<1x256xf32> to vector<1x256xf32>
    %10 = vector.broadcast %9 : vector<1x256xf32> to vector<4x256xf32>
    %c0_7 = arith.constant 0 : index
    %c4 = arith.constant 4 : index
    %c0_8 = arith.constant 0 : index
    %11 = vector.load %arg3[%c0_7, %c4, %c0_8] : memref<1x12x256xf32, #tpu.memory_space<vmem>>, vector<1x4x256xf32>
    %12 = vector.shape_cast %11 : vector<1x4x256xf32> to vector<4x256xf32>
    %13 = vector.shape_cast %10 : vector<4x256xf32> to vector<1x4x256xf32>
    tpu.vector_store %arg3[%c0_7, %c4, %c0_8], %13 {strides = array<i32>} : memref<1x12x256xf32, #tpu.memory_space<vmem>>, vector<1x4x256xf32>,
    %c0_9 = arith.constant 0 : index
    %c2 = arith.constant 2 : index
    %c0_10 = arith.constant 0 : index
    %14 = vector.load %arg2[%c0_9, %c2, %c0_10] : memref<1x3x256xf32, #tpu.memory_space<vmem>>, vector<1x1x256xf32>
    %15 = vector.shape_cast %14 : vector<1x1x256xf32> to vector<1x256xf32>
    %16 = vector.shape_cast %15 : vector<1x256xf32> to vector<1x256xf32>
    %17 = vector.broadcast %16 : vector<1x256xf32> to vector<4x256xf32>
    %c0_11 = arith.constant 0 : index
    %c8 = arith.constant 8 : index
    %c0_12 = arith.constant 0 : index
    %18 = vector.load %arg3[%c0_11, %c8, %c0_12] : memref<1x12x256xf32, #tpu.memory_space<vmem>>, vector<1x4x256xf32>
    %19 = vector.shape_cast %18 : vector<1x4x256xf32> to vector<4x256xf32>
    %20 = vector.shape_cast %17 : vector<4x256xf32> to vector<1x4x256xf32>
    tpu.vector_store %arg3[%c0_11, %c8, %c0_12], %20 {strides = array<i32>} : memref<1x12x256xf32, #tpu.memory_space<vmem>>, vector<1x4x256xf32>,
    return
  }
  func.func @transform_0(%arg0: i32, %arg1: i32) -> (i32, i32, i32) {
    %c0_i32 = arith.constant 0 : i32
    %c0_i32_0 = arith.constant 0 : i32
    return %arg0, %c0_i32, %arg1 : i32, i32, i32
  }
  func.func @transform_1(%arg0: i32, %arg1: i32) -> (i32, i32, i32) {
    %c0_i32 = arith.constant 0 : i32
    %c0_i32_0 = arith.constant 0 : i32
    return %arg0, %c0_i32, %arg1 : i32, i32, i32
  }
}

</mosaic_0001>

<llo_original>
// kernel: tpu_custom_call.1
$region0: #{tpu_custom_call.1}
  #allocation0 [shape = 'u32[]', space=smem, size = 0x4, offset = 0x4, fixed_abs, tag = 'smem constant byte address 0x4 - core index']
  #allocation1 [shape = 'u32[144,128]{1,0:T(1,128)}', space=vmem, size = 0x12000, scoped, tag = 'internal scratch']
  %s0 = inlined_call_operand.vmem [shape: f32[2,3,256], index: 0, kind: input, shape index: {}]
  %s1 = inlined_call_operand.vmem [shape: f32[2,12,256], index: 1, kind: output, shape index: {}]
  %s2 = sld [smem:[#allocation0]]
  $region37: #{tpu_custom_call.1} parent=0
    _
  %s4 = ssub.s32 1, %s2
  %s5 = scalar_select 0, %s4, %s2
  loop: start=0, step=1, limit=4
  $region2: #{tpu_custom_call.1} parent=0 // loop_pre_header
    _
  $region3: #{tpu_custom_call.1} parent=0 // loop_header
    %s7 = sphi 0, %s11
    %p8 = scmp.ge.s32.totalorder %s7, 4
    %s14 = sphi 0, %s26
    %s15 = sphi 0, %s22
    %s16 = sphi 0, %s14
    %s17 = sphi 0, %s15
    %s18 = sphi 0, %s16
    %s19 = sphi 0, %s17
    %s31 = sphi 0, %s33
    %s34 = sphi 0, %s31
    %s35 = sphi 0, %s34
    %s51 = sphi 0, %s35
    %s59 = sphi 0, %s61
    %s62 = sphi 0, %s59
    %s63 = sphi 0, %s62
    %s79 = sphi 0, %s63
  $region4: #{tpu_custom_call.1} parent=0 // loop_header_branch
    %10 = sbr.rel (%p8) target = $region8
  $region5: #{tpu_custom_call.1} parent=0 // loop_body
    %s12 = ssub.s32 %s7, 1
    %s13 = ssub.s32 %s7, 2
    %s20 = sadd.s32 1, %s15
    %p21 = scmp.ge.s32.totalorder %s20, 1
    %s22 = scalar_select %p21, 0, %s20
    %s23 = sadd.s32 1, %s14
    %s24 = scalar_select %p21, %s23, %s14
    %p25 = scmp.ge.s32.totalorder %s24, 2
    %s26 = scalar_select %p25, 0, %s24
    %s27 = ssub.s32 %s14, %s26
    %s28 = ssub.s32 %s15, %s22
    %s29 = sor.u32 %s27, %s28
    %p30 = scmp.eq.s32.totalorder %s29, 0
    %s32 = sadd.s32 %s31, 1
    %s33 = scalar_select %p30, %s31, %s32
    %p36 = pneg %p30
    %p37 = scmp.eq.s32.totalorder %s7, 1
    %p38 = por %p36, %p37
    %p39 = scmp.ne.s32.totalorder %s31, %s34
    %p40 = scmp.eq.s32.totalorder %s7, 0
    %p41 = por %p39, %p40
    %p42 = scmp.ne.s32.totalorder %s31, %s34
    %p43 = scmp.eq.s32.totalorder %s12, 1
    %p44 = por %p42, %p43
    %p45 = scmp.ne.s32.totalorder %s34, %s35
    %p46 = scmp.eq.s32.totalorder %s12, 0
    %p47 = por %p45, %p46
    %p48 = scmp.ne.s32.totalorder %s34, %s35
    %p49 = scmp.eq.s32.totalorder %s13, 1
    %p50 = por %p48, %p49
    %p52 = scmp.ne.s32.totalorder %s35, %s51
    %p53 = scmp.eq.s32.totalorder %s13, 0
    %p54 = por %p52, %p53
    %s55 = ssub.s32 %s14, %s26
    %s56 = ssub.s32 %s15, %s22
    %s57 = sor.u32 %s55, %s56
    %p58 = scmp.eq.s32.totalorder %s57, 0
    %s60 = sadd.s32 %s59, 1
    %s61 = scalar_select %p58, %s59, %s60
    %p64 = pneg %p58
    %p65 = scmp.eq.s32.totalorder %s7, 1
    %p66 = por %p64, %p65
    %p67 = scmp.ne.s32.totalorder %s59, %s62
    %p68 = scmp.eq.s32.totalorder %s7, 0
    %p69 = por %p67, %p68
    %p70 = scmp.ne.s32.totalorder %s59, %s62
    %p71 = scmp.eq.s32.totalorder %s12, 1
    %p72 = por %p70, %p71
    %p73 = scmp.ne.s32.totalorder %s62, %s63
    %p74 = scmp.eq.s32.totalorder %s12, 0
    %p75 = por %p73, %p74
    %p76 = scmp.ne.s32.totalorder %s62, %s63
    %p77 = scmp.eq.s32.totalorder %s13, 1
    %p78 = por %p76, %p77
    %p80 = scmp.ne.s32.totalorder %s63, %s79
    %p81 = scmp.eq.s32.totalorder %s13, 0
    %p82 = por %p80, %p81
    %p83 = scmp.le.s32.totalorder 1, %s7
    %p84 = scmp.lt.s32.totalorder %s7, 3
    %p85 = pnand %p83, %p84
    %p86 = pneg %p85
    // Predicated region
    $region9: #{tpu_custom_call.1} parent=5 // pred_check
      _
    $region10: #{tpu_custom_call.1} parent=5 // pred_check_branch
      %88 = sbr.rel (%p85) target = $region12
    $region11: #{tpu_custom_call.1} parent=5 // pred_region
      %s89 = ssub.s32 %s7, 1
    $region12: #{tpu_custom_call.1} parent=5 // pred_fallthru
      _
    %p90 = scmp.lt.s32.totalorder %s7, 2
    // Predicated region
    $region13: #{tpu_custom_call.1} parent=5 // pred_check
      %p91 = pneg %p90
    $region14: #{tpu_custom_call.1} parent=5 // pred_check_branch
      %93 = sbr.rel (%p91) target = $region16
    $region15: #{tpu_custom_call.1} parent=5 // pred_region
      // Predicated region
      $region17: #{tpu_custom_call.1} parent=15 // pred_check
        %p94 = pneg %p41
      $region18: #{tpu_custom_call.1} parent=15 // pred_check_branch
        %96 = sbr.rel (%p94) target = $region20
      $region19: #{tpu_custom_call.1} parent=15 // pred_region
        %s97 = smul.u32 2, %s15
        %p98 = scmp.lt.s32.totalorder %s14, 1
        %s99 = scalar_select %p98, %s14, 1
        %p100 = scmp.lt.s32.totalorder %s97, 1
        %s101 = scalar_select %p100, %s97, 1
        %s102 = smul.addr %s99, 2
        %s103 = sadd.s32 %s101, %s102
        %s104 = smul.addr %s103, 4
        %s105 = scalar_lea.vmem %s0, %s104
        %s106 = smul.u32 2, %s15
      $region20: #{tpu_custom_call.1} parent=15 // pred_fallthru
        _
    $region16: #{tpu_custom_call.1} parent=5 // pred_fallthru
      _
    %p107 = scmp.le.s32.totalorder 1, %s7
    %p108 = scmp.lt.s32.totalorder %s7, 3
    %p109 = pnand %p107, %p108
    %p110 = pneg %p109
    // Predicated region
    $region21: #{tpu_custom_call.1} parent=5 // pred_check
      _
    $region22: #{tpu_custom_call.1} parent=5 // pred_check_branch
      %112 = sbr.rel (%p109) target = $region24
    $region23: #{tpu_custom_call.1} parent=5 // pred_region
      %s113 = ssub.s32 %s7, 1
      %s114 = smul.u32 2, %s17
      %p115 = scmp.lt.s32.totalorder %s16, 1
      %s116 = scalar_select %p115, %s16, 1
      %p117 = scmp.lt.s32.totalorder %s114, 1
      %s118 = scalar_select %p117, %s114, 1
      %s119 = smul.addr %s116, 2
      %s120 = sadd.s32 %s118, %s119
      %s121 = smul.addr %s120, 4
      %s122 = scalar_lea.vmem %s0, %s121
      %p123 = pneg %p47
      %p124 = pneg %p44
      %p125 = pneg %p75
      %p126 = pneg %p72
      %s127 = smul.u32 2, %s17
      %p128 = scmp.lt.s32.totalorder %s16, 1
      %s129 = scalar_select %p128, %s16, 1
      %p130 = scmp.lt.s32.totalorder %s127, 1
      %s131 = scalar_select %p130, %s127, 1
      %s132 = smul.addr %s129, 4
      %s133 = sadd.s32 %s131, %s132
      %s134 = smul.addr %s133, 8
      %s135 = scalar_lea.vmem %s1, %s134
      %s136 = smul.u32 2, %s17
      %p137 = scmp.lt.s32.totalorder %s16, 1
      %s138 = scalar_select %p137, %s16, 1
      %p139 = scmp.lt.s32.totalorder %s136, 1
      %s140 = scalar_select %p139, %s136, 1
      %s141 = smul.addr %s138, 2
      %s142 = sadd.s32 %s140, %s141
      %s143 = smul.addr %s142, 4
      %s144 = scalar_lea.vmem %s0, %s143
      %s145 = smul.u32 2, %s17
      %s146 = smul.u32 2, %s17
      %p147 = scmp.lt.s32.totalorder %s16, 1
      %s148 = scalar_select %p147, %s16, 1
      %p149 = scmp.lt.s32.totalorder %s146, 1
      %s150 = scalar_select %p149, %s146, 1
      %s151 = smul.addr %s148, 4
      %s152 = sadd.s32 %s150, %s151
      %s153 = smul.addr %s152, 8
      %s154 = scalar_lea.vmem %s1, %s153
      %s155 = smul.u32 2, %s17
      %v156 = vld [vmem:[%s144] ss:$4 sm:$0x3]
      %v158 = vlaneseq
      %v159 = vshrl.u32 %v158, 7
      %v160 = vsub.s32 0, %v159
      %v161 = vrot.slane %v156, %v160
      %v162 = vlaneseq
      %v163 = vshrl.u32 %v162, 7
      %v164 = vsub.s32 1, %v163
      %v165 = vrot.slane %v156, %v164
      %168 = vst [vmem:[%s154] sm:$0xf] %v161
      %169 = vst [vmem:[%s154 + $0x8] sm:$0xf] %v165
      %s170 = scalar_lea.vmem %s144, 1
      %v171 = vld [vmem:[%s170] ss:$4 sm:$0x3]
      %v173 = vlaneseq
      %v174 = vshrl.u32 %v173, 7
      %v175 = vsub.s32 0, %v174
      %v176 = vrot.slane %v171, %v175
      %v177 = vlaneseq
      %v178 = vshrl.u32 %v177, 7
      %v179 = vsub.s32 1, %v178
      %v180 = vrot.slane %v171, %v179
      %183 = vst [vmem:[%s154] sm:$0xf0] %v176
      %184 = vst [vmem:[%s154 + $0x8] sm:$0xf0] %v180
      %s185 = scalar_lea.vmem %s144, 2
      %v186 = vld [vmem:[%s185] ss:$4 sm:$0x3]
      %v188 = vlaneseq
      %v189 = vshrl.u32 %v188, 7
      %v190 = vsub.s32 0, %v189
      %v191 = vrot.slane %v186, %v190
      %v192 = vlaneseq
      %v193 = vshrl.u32 %v192, 7
      %v194 = vsub.s32 1, %v193
      %v195 = vrot.slane %v186, %v194
      %198 = vst [vmem:[%s154 + $0x10] sm:$0xf] %v191
      %199 = vst [vmem:[%s154 + $0x18] sm:$0xf] %v195
      %s200 = smul.u32 2, %s17
      %p201 = scmp.lt.s32.totalorder %s16, 1
      %s202 = scalar_select %p201, %s16, 1
      %p203 = scmp.lt.s32.totalorder %s200, 1
      %s204 = scalar_select %p203, %s200, 1
      %s205 = smul.addr %s202, 4
      %s206 = sadd.s32 %s204, %s205
      %s207 = smul.addr %s206, 8
      %s208 = scalar_lea.vmem %s1, %s207
      // Predicated region
      $region25: #{tpu_custom_call.1} parent=23 // pred_check
        %p209 = pneg %p72
      $region26: #{tpu_custom_call.1} parent=23 // pred_check_branch
        %211 = sbr.rel (%p209) target = $region28
      $region27: #{tpu_custom_call.1} parent=23 // pred_region
        %s212 = smul.u32 2, %s17
      $region28: #{tpu_custom_call.1} parent=23 // pred_fallthru
        _
    $region24: #{tpu_custom_call.1} parent=5 // pred_fallthru
      _
    %p213 = scmp.le.s32.totalorder 2, %s7
    // Predicated region
    $region29: #{tpu_custom_call.1} parent=5 // pred_check
      %p214 = pneg %p213
    $region30: #{tpu_custom_call.1} parent=5 // pred_check_branch
      %216 = sbr.rel (%p214) target = $region32
    $region31: #{tpu_custom_call.1} parent=5 // pred_region
      %s217 = ssub.s32 %s7, 2
      // Predicated region
      $region33: #{tpu_custom_call.1} parent=31 // pred_check
        %p218 = pneg %p78
      $region34: #{tpu_custom_call.1} parent=31 // pred_check_branch
        %220 = sbr.rel (%p218) target = $region36
      $region35: #{tpu_custom_call.1} parent=31 // pred_region
        %s221 = smul.u32 2, %s19
        %p222 = scmp.lt.s32.totalorder %s18, 1
        %s223 = scalar_select %p222, %s18, 1
        %p224 = scmp.lt.s32.totalorder %s221, 1
        %s225 = scalar_select %p224, %s221, 1
        %s226 = smul.addr %s223, 4
        %s227 = sadd.s32 %s225, %s226
        %s228 = smul.addr %s227, 8
        %s229 = scalar_lea.vmem %s1, %s228
      $region36: #{tpu_custom_call.1} parent=31 // pred_fallthru
        _
    $region32: #{tpu_custom_call.1} parent=5 // pred_fallthru
      _
  $region6: #{tpu_custom_call.1} parent=0 // loop_footer
    %s11 = sadd.s32 1, %s7
  $region7: #{tpu_custom_call.1} parent=0 // loop_footer_branch
    %6 = sbr.rel target = $region3
  $region8: #{tpu_custom_call.1} parent=0 // loop_exit
    _

</llo_original>
